<compile_context>
chip_gen: v6e
topology: v6e:2x2x1
jax: 0.10.0
libtpu: 0.0.40
codegen_flags: <defaults>
</compile_context>

<pallas_src>
import numpy as np
import jax
import jax.numpy as jnp
from jax import lax
from jax.experimental import pallas as pl
from jax.experimental.pallas import tpu as pltpu

_QUANT_LOSS_CONST = float(np.log(1.5))  # cal_distance(|u|, ones) == 0.5 exactly


def _round_up(x, m):
    return -(-int(x) // int(m)) * int(m)


def _vmem_capacity_bytes():
    """Per-core VMEM capacity; conservative (v7x, 64 MiB) if unknown."""
    try:
        return int(pltpu.get_tpu_info().vmem_capacity_bytes)
    except Exception:
        return 64 << 20


def _detect_num_tensorcores():
    """Best-effort TensorCores per device (2 on v7x-class megacore, else 1)."""
    try:
        info = pltpu.get_tpu_info()
        for name in ("num_tensorcores", "tensorcore_count", "num_cores",
                     "cores_per_chip", "core_count"):
            v = getattr(info, name, None)
            if isinstance(v, int) and v > 0:
                return max(1, min(int(v), 2))
    except Exception:
        pass
    return 1


def _choose_tile_d(B, D, itemsize, num_cores, tile_bytes, vmem_cap):
    """Feature-axis tile sized in BYTES (2-8 MiB sweet spot), multiple of 128.

    Per-grid-step overhead is ~0.35 us, so each tile's DMA must dwarf it; the
    double-buffered pair must also stay well under the scoped-VMEM budget on
    every generation (v7x: 64 MiB physical / 32 MiB scoped default).
    """
    if tile_bytes is None:
        tile_bytes = min(max(vmem_cap // 16, 2 << 20), 8 << 20)
    tile_d = max(128, (int(tile_bytes) // max(B * itemsize, 1)) // 128 * 128)
    d128 = _round_up(D, 128)
    per_core_d = _round_up(-(-d128 // num_cores), 128)   # no point exceeding this
    return min(tile_d, per_core_d)


# ---------------------------------------------------------------------------
# Kernel 1: D-tiled fingerprint Gram reduction (the only large-D work).
# Each core accumulates its D-slice of the Gram directly into its own (B, B)
# output block; no per-tile VPU/XLU work besides the MXU matmul.
# ---------------------------------------------------------------------------
def _fp_gram_kernel(fp_ref, pdots_ref):
    @pl.when(pl.program_id(1) == 0)
    def _init():
        pdots_ref[...] = jnp.zeros_like(pdots_ref)

    fp_t = fp_ref[...]                       # (B, TILE_D), at its HBM storage dtype
    pdots_ref[...] += jnp.einsum('id,jd->ij', fp_t, fp_t,
                                 preferred_element_type=jnp.float32)


# ---------------------------------------------------------------------------
# Kernel 2: tiny (B, B) epilogue — combine partial Grams, normalize, and
# evaluate the weighted structure-aware contrastive loss.
# ---------------------------------------------------------------------------
def _l_wsc_epilogue_kernel(cond_ref, u_ref, lab_c_ref, lab_r_ref, sw_c_ref,
                           sw_r_ref, pdots_ref, out_ref):
    b = u_ref.shape[0]

    # Combine per-core partial Grams.
    dots = jnp.sum(pdots_ref[...], axis=0)                          # (B, B) f32

    # Row sum-of-squares straight off the Gram diagonal: the MXU already
    # accumulated exact (widened) products in f32, so this is as accurate as a
    # separate sumsq pass over the stored data — and the sim diagonal is now
    # exactly 1.  Zero padding contributes nothing.
    rows = lax.broadcasted_iota(jnp.int32, (b, b), 0)
    cols = lax.broadcasted_iota(jnp.int32, (b, b), 1)
    sumsq = jnp.sum(jnp.where(rows == cols, dots, 0.0), axis=-1, keepdims=True)

    # torch cosine_similarity: max(sumsq, 1e-16) == (max(norm, 1e-8))^2.
    rnorm = lax.rsqrt(jnp.maximum(sumsq, 1e-16))                    # (B, 1)
    sim = dots * (rnorm * rnorm.T)                                  # (B, B)

    # Label agreement + pair weights; `cond` (pos AND neg pairs exist) was
    # precomputed on the host, so no in-kernel (B, B) reductions are needed.
    y_pos = lab_r_ref[...] == lab_c_ref[...]                        # (B, B) bool
    use_w = cond_ref[0] != 0
    w = jnp.where(use_w, sw_c_ref[...] * sw_r_ref[...],
                  jnp.ones((b, b), jnp.float32))

    # cal_distance(u, u) — matches the PyTorch formula exactly, including the
    # extra +1e-6 added to the norm product.
    u = u_ref[...].astype(jnp.float32)
    uc = u - jnp.mean(u, axis=-1, keepdims=True)
    ip = jnp.einsum('ik,jk->ij', uc, uc, preferred_element_type=jnp.float32)
    n = jnp.sqrt(jnp.sum(uc * uc, axis=-1, keepdims=True) + 1e-6)   # (B, 1)
    pr = ip / (n * n.T + 1e-6)
    d = jnp.clip(1.0 - (pr + 1.0) * 0.5, 1e-6, 1.0 - 1e-6)

    # Single-log select form (y is binary, so this equals:
    #   sim*y*(-log(1-d)) - exp(sim)*(1-y)*log(d)).
    coef = jnp.where(y_pos, sim, jnp.exp(sim))
    arg = jnp.where(y_pos, 1.0 - d, d)
    contrast_loss = jnp.sum(-(w * coef) * jnp.log(arg)) * (1.0 / (b * b))

    # Quantization loss is the constant log(1.5): mean-centering the all-ones
    # code is exactly zero, so cal_distance(|u|, ones) is 0.5 element-wise
    # (the PyTorch reference is equally degenerate).
    quant_loss = jnp.float32(_QUANT_LOSS_CONST)

    out_ref[0] = contrast_loss + 0.5 * quant_loss
    out_ref[1] = contrast_loss
    out_ref[2] = quant_loss
    # TODO(synk): for B >= ~512 tile this epilogue over rows of B to cap the
    # live (B, B) f32 temporaries under v7x's 32 MiB scoped-VMEM budget.


def l_wsc_forward(u, label, img_fp, global_weights, *,
                  gram_dtype=jnp.bfloat16, tile_bytes=None, num_cores=None):
    """Returns (loss, contrast_loss, quantization_loss) as f32 scalars."""
    B, bit = u.shape
    D = int(np.prod(img_fp.shape[1:]))

    # ---- host-side glue (pure indexing / tiny reductions, stays in XLA) ----
    # The kernel is HBM-bound on the fingerprint read, so store/stream it at
    # gram_dtype (bf16 default): halving the stored bytes ~halves runtime.
    # TODO(synk): in production have the upstream producer emit img_fp in bf16
    # so this one-time cast never materialises an extra f32 pass over the data.
    fp = img_fp.reshape(B, D)
    if fp.dtype != np.dtype(gram_dtype):
        fp = fp.astype(gram_dtype)
    itemsize = np.dtype(gram_dtype).itemsize

    lab = label.astype(jnp.int32)
    lab_c = lab.reshape(B, 1)
    lab_r = lab.reshape(1, B)
    sw = global_weights[lab].astype(jnp.float32)          # per-class weight gather
    sw_c = sw.reshape(B, 1)
    sw_r = sw.reshape(1, B)
    # "Both positive and negative pairs exist" -> one SMEM scalar.
    n_pos = jnp.sum((lab_r == lab_c).astype(jnp.int32))
    cond = jnp.logical_and(n_pos != 0, n_pos != B * B).astype(jnp.int32).reshape(1)

    # ---- tiling: byte-sized D tiles, zero-padded (exact), per-core split ----
    if num_cores is None:
        num_cores = _detect_num_tensorcores()
    num_cores = max(1, int(num_cores))
    vmem_cap = _vmem_capacity_bytes()
    tile_d = _choose_tile_d(B, D, itemsize, num_cores, tile_bytes, vmem_cap)
    total_tiles = _round_up(-(-D // tile_d), num_cores)
    tiles_per_core = total_tiles // num_cores
    d_pad = total_tiles * tile_d
    if d_pad != D:
        fp = jnp.pad(fp, ((0, 0), (0, d_pad - D)))        # zeros contribute nothing

    vmem_limit = int(min(vmem_cap,
                         max(2 * B * tile_d * itemsize    # double-buffered fp tile
                             + 2 * B * B * 4              # resident Gram block
                             + (2 << 20),                 # headroom / internal scratch
                             32 << 20)))

    # ---- kernel 1: streamed Gram reduction over D ----
    pdots = pl.pallas_call(
        _fp_gram_kernel,
        grid=(num_cores, tiles_per_core),
        in_specs=[
            pl.BlockSpec((B, tile_d),
                         lambda c, k, t=tiles_per_core: (0, c * t + k)),
        ],
        out_specs=pl.BlockSpec((None, B, B), lambda c, k: (c, 0, 0)),
        out_shape=jax.ShapeDtypeStruct((num_cores, B, B), jnp.float32),
        compiler_params=pltpu.CompilerParams(
            dimension_semantics=("parallel", "arbitrary"),
            vmem_limit_bytes=vmem_limit),
        cost_estimate=pl.CostEstimate(
            flops=2 * B * B * d_pad,
            transcendentals=0,
            bytes_accessed=B * d_pad * itemsize + num_cores * B * B * 4),
    )(fp)

    # ---- kernel 2: tiny epilogue ----
    out = pl.pallas_call(
        _l_wsc_epilogue_kernel,
        grid=(1,),
        in_specs=[
            pl.BlockSpec(memory_space=pltpu.MemorySpace.SMEM),     # cond (1,)
            pl.BlockSpec((B, bit), lambda i: (0, 0)),              # u
            pl.BlockSpec((B, 1), lambda i: (0, 0)),                # label (col)
            pl.BlockSpec((1, B), lambda i: (0, 0)),                # label (row)
            pl.BlockSpec((B, 1), lambda i: (0, 0)),                # weight (col)
            pl.BlockSpec((1, B), lambda i: (0, 0)),                # weight (row)
            pl.BlockSpec((num_cores, B, B), lambda i: (0, 0, 0)),  # partial Grams
        ],
        out_specs=pl.BlockSpec(memory_space=pltpu.MemorySpace.SMEM),
        out_shape=jax.ShapeDtypeStruct((3,), jnp.float32),
        compiler_params=pltpu.CompilerParams(
            dimension_semantics=("arbitrary",)),
        cost_estimate=pl.CostEstimate(
            flops=2 * B * B * bit + 24 * B * B,
            transcendentals=3 * B * B,
            bytes_accessed=(num_cores * B * B + B * bit + 4 * B + 4) * 4),
    )(cond, u, lab_c, lab_r, sw_c, sw_r, pdots)

    return out[0], out[1], out[2]


def _reference_forward(u, label, img_fp, gw):
    """Pure-JAX mirror of the PyTorch forward, used for a correctness check."""
    B, _ = u.shape
    fp = img_fp.reshape(B, -1)
    norms = jnp.maximum(jnp.sqrt(jnp.sum(fp * fp, axis=-1, keepdims=True)), 1e-8)
    sim = (fp @ fp.T) / (norms * norms.T)
    y = (label[None, :] == label[:, None]).astype(jnp.float32)
    sw = gw[label]
    cond = jnp.logical_and(jnp.sum(1.0 - y) != 0.0, jnp.sum(y) != 0.0)
    w = jnp.where(cond, sw[:, None] * sw[None, :], 1.0)

    def cal_d(hi, hj):
        hic = hi - hi.mean(-1, keepdims=True)
        hjc = hj - hj.mean(-1, keepdims=True)
        ip = hic @ hjc.T
        nrm = (jnp.sqrt((hic ** 2).sum(1, keepdims=True) + 1e-6)
               @ jnp.sqrt((hjc ** 2).sum(1, keepdims=True) + 1e-6).T)
        return 1.0 - ((ip / (nrm + 1e-6)) + 1.0) / 2.0

    d = jnp.clip(cal_d(u, u), 1e-6, 1.0 - 1e-6)
    cl = jnp.mean(w * (sim * y * -jnp.log(1.0 - d)
                       - jnp.exp(sim) * (1.0 - y) * jnp.log(d)))
    ql = jnp.mean(jnp.log(1.0 + cal_d(jnp.abs(u), jnp.ones_like(u))))
    return cl + 0.5 * ql, cl, ql


if __name__ == "__main__":
    key = jax.random.PRNGKey(0)
    k1, k2, k3 = jax.random.split(key, 3)

    B, bit, C, H, W, num_classes = 8, 32, 4, 16, 16, 4
    u = jax.random.normal(k1, (B, bit), dtype=jnp.float32)
    label = jax.random.randint(k2, (B,), 0, num_classes, dtype=jnp.int32)
    img_fp = jax.random.normal(k3, (B, C, H, W), dtype=jnp.float32)
    gweight = jnp.linspace(0.5, 1.5, num_classes).astype(jnp.float32)

    r_loss, r_cl, r_ql = _reference_forward(u, label, img_fp, gweight)

    # 1) Exact-precision path: f32 fingerprint storage + f32 Gram. The small
    #    tile_bytes forces tile_d=384 on D=1024 -> 3 tiles + zero padding,
    #    exercising both the accumulator and the ragged-D padding path.
    loss, cl, ql = l_wsc_forward(u, label, img_fp, gweight,
                                 gram_dtype=jnp.float32,
                                 tile_bytes=B * 384 * 4, num_cores=1)
    jax.block_until_ready((loss, cl, ql))
    assert np.allclose(np.asarray(loss), np.asarray(r_loss), rtol=1e-4, atol=1e-5), (loss, r_loss)
    assert np.allclose(np.asarray(cl), np.asarray(r_cl), rtol=1e-4, atol=1e-5), (cl, r_cl)
    assert np.allclose(np.asarray(ql), np.asarray(r_ql), rtol=1e-4, atol=1e-5), (ql, r_ql)

    # 2) Two-TensorCore layout (v7x): size-2 "parallel" core axis with
    #    per-core partial Grams. Runs (serially) and stays exact on 1-TC chips.
    loss2, cl2, ql2 = l_wsc_forward(u, label, img_fp, gweight,
                                    gram_dtype=jnp.float32,
                                    tile_bytes=B * 384 * 4, num_cores=2)
    jax.block_until_ready((loss2, cl2, ql2))
    assert np.allclose(np.asarray(loss2), np.asarray(r_loss), rtol=1e-4, atol=1e-5), (loss2, r_loss)
    assert np.allclose(np.asarray(cl2), np.asarray(r_cl), rtol=1e-4, atol=1e-5), (cl2, r_cl)
    assert np.allclose(np.asarray(ql2), np.asarray(r_ql), rtol=1e-4, atol=1e-5), (ql2, r_ql)

    # 3) Production path: bf16 fingerprint in HBM (halves the dominant DMA),
    #    auto byte-sized tiles, auto core count. Tolerance reflects the bf16
    #    storage/Gram quantization error on the similarities.
    loss_b, cl_b, ql_b = l_wsc_forward(u, label, img_fp, gweight)
    jax.block_until_ready((loss_b, cl_b, ql_b))
    assert np.allclose(np.asarray(loss_b), np.asarray(r_loss), rtol=1e-2, atol=2e-3), (loss_b, r_loss)
    assert np.allclose(np.asarray(cl_b), np.asarray(r_cl), rtol=1e-2, atol=2e-3), (cl_b, r_cl)
    assert np.allclose(np.asarray(ql_b), np.asarray(r_ql), rtol=1e-5, atol=1e-6), (ql_b, r_ql)

    print("KERNEL_OK")
</pallas_src>

<mosaic_0001>
module attributes {stable_mosaic.version = 11 : i64} {
  func.func @_fp_gram_kernel(%arg0: i32, %arg1: i32, %arg2: memref<8x384xf32, #tpu.memory_space<vmem>>, %arg3: memref<1x8x8xf32, #tpu.memory_space<vmem>>) attributes {dimension_semantics = [#tpu.dimension_semantics<parallel>, #tpu.dimension_semantics<arbitrary>], iteration_bounds = array<i64: 1, 3>, scalar_prefetch = 0 : i64, scratch_operands = 0 : i64, tpu.core_type = #tpu.core_type<tc>, window_params = [{transform_indices = @transform_0, window_bounds = array<i64: 8, 384>}, {transform_indices = @transform_1, window_bounds = array<i64: 1, 8, 8>}]} {
    %c0_i32 = arith.constant 0 : i32
    %0 = arith.cmpi eq, %arg1, %c0_i32 : i32
    %1 = arith.extui %0 : i1 to i32
    %c0_i32_0 = arith.constant 0 : i32
    %2 = arith.cmpi ne, %1, %c0_i32_0 : i32
    scf.if %2 {
      %cst_8 = arith.constant 0.000000e+00 : f32
      %11 = vector.broadcast %cst_8 : f32 to vector<8x8xf32>
      %c0_9 = arith.constant 0 : index
      %c0_10 = arith.constant 0 : index
      %c0_11 = arith.constant 0 : index
      %12 = vector.load %arg3[%c0_9, %c0_10, %c0_11] : memref<1x8x8xf32, #tpu.memory_space<vmem>>, vector<1x8x8xf32>
      %13 = vector.shape_cast %12 : vector<1x8x8xf32> to vector<8x8xf32>
      %14 = vector.shape_cast %11 : vector<8x8xf32> to vector<1x8x8xf32>
      tpu.vector_store %arg3[%c0_9, %c0_10, %c0_11], %14 {strides = array<i32>} : memref<1x8x8xf32, #tpu.memory_space<vmem>>, vector<1x8x8xf32>,
    } else {
    }
    %c0 = arith.constant 0 : index
    %c0_1 = arith.constant 0 : index
    %3 = vector.load %arg2[%c0, %c0_1] : memref<8x384xf32, #tpu.memory_space<vmem>>, vector<8x384xf32>
    %c0_2 = arith.constant 0 : index
    %c0_3 = arith.constant 0 : index
    %c0_4 = arith.constant 0 : index
    %4 = vector.load %arg3[%c0_2, %c0_3, %c0_4] : memref<1x8x8xf32, #tpu.memory_space<vmem>>, vector<1x8x8xf32>
    %5 = vector.shape_cast %4 : vector<1x8x8xf32> to vector<8x8xf32>
    "tpu.trace_start"() <{level = 10 : i32, message = "id,jd->ij"}> : () -> ()
    %cst = arith.constant dense<0.000000e+00> : vector<8x8xf32>
    %6 = tpu.matmul %3, %3, %cst {dimension_numbers = #tpu.dot_dimension_numbers<[1], [1], [0], [0], [0, 0, 1, 0], [], []>} : vector<8x384xf32>, vector<8x384xf32>, vector<8x8xf32> -> vector<8x8xf32>
    "tpu.trace_stop"() : () -> ()
    %7 = arith.addf %5, %6 : vector<8x8xf32>
    %c0_5 = arith.constant 0 : index
    %c0_6 = arith.constant 0 : index
    %c0_7 = arith.constant 0 : index
    %8 = vector.load %arg3[%c0_5, %c0_6, %c0_7] : memref<1x8x8xf32, #tpu.memory_space<vmem>>, vector<1x8x8xf32>
    %9 = vector.shape_cast %8 : vector<1x8x8xf32> to vector<8x8xf32>
    %10 = vector.shape_cast %7 : vector<8x8xf32> to vector<1x8x8xf32>
    tpu.vector_store %arg3[%c0_5, %c0_6, %c0_7], %10 {strides = array<i32>} : memref<1x8x8xf32, #tpu.memory_space<vmem>>, vector<1x8x8xf32>,
    return
  }
  func.func @transform_0(%arg0: i32, %arg1: i32) -> (i32, i32) {
    %c3_i32 = arith.constant 3 : i32
    %0 = arith.muli %arg0, %c3_i32 : i32
    %1 = arith.addi %0, %arg1 : i32
    %c0_i32 = arith.constant 0 : i32
    %c0_i32_0 = arith.constant 0 : i32
    return %c0_i32, %1 : i32, i32
  }
  func.func @transform_1(%arg0: i32, %arg1: i32) -> (i32, i32, i32) {
    %c0_i32 = arith.constant 0 : i32
    %c0_i32_0 = arith.constant 0 : i32
    %c0_i32_1 = arith.constant 0 : i32
    return %arg0, %c0_i32, %c0_i32_0 : i32, i32, i32
  }
}

</mosaic_0001>

<llo_original>
// kernel: tpu_custom_call.1
$region0: #{tpu_custom_call.1}
  #allocation0 [shape = 'u32[]', space=smem, size = 0x4, offset = 0x4, fixed_abs, tag = 'smem constant byte address 0x4 - core index']
  #allocation1 [shape = 'u32[144,128]{1,0:T(1,128)}', space=vmem, size = 0x12000, scoped, tag = 'internal scratch']
  %s0 = inlined_call_operand.hbm [shape: f32[8,1152], index: 0, kind: input, shape index: {}]
  %s1 = inlined_call_operand.hbm [shape: f32[1,8,8], index: 1, kind: output, shape index: {}]
  %s2 = sld [smem:[#allocation0]]
  $region45: #{tpu_custom_call.1} parent=0
    _
  %s4 = ssub.s32 1, %s2
  %s5 = scalar_select 0, %s4, %s2
  $region1: #{tpu_custom_call.1} parent=0
    #allocation2 [shape = 'u8[24576]{0}', space=vmem, size = 0x6000, scoped, tag = 'input window, operand 0']
    #allocation3 [shape = 's32[2]{0}', space=sflag, size = 0x8, scoped, tag = 'scoped memory for tpu_custom_call.1']
    #allocation4 [shape = 's32[2]{0}', space=sflag, size = 0x8, scoped, tag = 'scoped memory for tpu_custom_call.1']
    #allocation5 [shape = 'u8[4096]{0}', space=vmem, size = 0x1000, scoped, tag = 'output window, operand 0, single buffered']
    %6 = vsyncpa [#allocation3], 0
    %s7 = scalar_lea.sflag [#allocation3], 1
    %8 = vsyncpa %s7, 0
    %9 = vsyncpa [#allocation4], 0
    loop: start=0, step=1, limit=5
    $region2: #{tpu_custom_call.1} parent=1 // loop_pre_header
      _
    $region3: #{tpu_custom_call.1} parent=1 // loop_header
      %s11 = sphi 0, %s15
      %p12 = scmp.ge.s32.totalorder %s11, 5
      %s18 = sphi 0, %s30
      %s19 = sphi 0, %s26
      %s20 = sphi 0, %s18
      %s21 = sphi 0, %s19
      %s22 = sphi 0, %s20
      %s23 = sphi 0, %s21
      %s37 = sphi 0, %s39
      %s40 = sphi 0, %s37
      %s41 = sphi 0, %s40
      %s57 = sphi 0, %s41
      %s63 = sphi 0, %s65
      %s66 = sphi 0, %s63
      %s67 = sphi 0, %s66
      %s83 = sphi 0, %s67
    $region4: #{tpu_custom_call.1} parent=1 // loop_header_branch
      %14 = sbr.rel (%p12) target = $region8
    $region5: #{tpu_custom_call.1} parent=1 // loop_body
      %s16 = ssub.s32 %s11, 1
      %s17 = ssub.s32 %s11, 2
      %s24 = sadd.s32 1, %s19
      %p25 = scmp.ge.s32.totalorder %s24, 3
      %s26 = scalar_select %p25, 0, %s24
      %s27 = sadd.s32 1, %s18
      %s28 = scalar_select %p25, %s27, %s18
      %p29 = scmp.ge.s32.totalorder %s28, 1
      %s30 = scalar_select %p29, 0, %s28
      %s31 = smul.u32 %s18, 3
      %s32 = sadd.s32 %s31, %s19
      %s33 = smul.u32 %s30, 3
      %s34 = sadd.s32 %s33, %s26
      %s35 = ssub.s32 %s32, %s34
      %p36 = scmp.eq.s32.totalorder %s35, 0
      %s38 = sadd.s32 %s37, 1
      %s39 = scalar_select %p36, %s37, %s38
      %p42 = pneg %p36
      %p43 = scmp.eq.s32.totalorder %s11, 2
      %p44 = por %p42, %p43
      %p45 = scmp.ne.s32.totalorder %s37, %s40
      %p46 = scmp.eq.s32.totalorder %s11, 0
      %p47 = por %p45, %p46
      %p48 = scmp.ne.s32.totalorder %s37, %s40
      %p49 = scmp.eq.s32.totalorder %s16, 2
      %p50 = por %p48, %p49
      %p51 = scmp.ne.s32.totalorder %s40, %s41
      %p52 = scmp.eq.s32.totalorder %s16, 0
      %p53 = por %p51, %p52
      %p54 = scmp.ne.s32.totalorder %s40, %s41
      %p55 = scmp.eq.s32.totalorder %s17, 2
      %p56 = por %p54, %p55
      %p58 = scmp.ne.s32.totalorder %s41, %s57
      %p59 = scmp.eq.s32.totalorder %s17, 0
      %p60 = por %p58, %p59
      %s61 = ssub.s32 %s18, %s30
      %p62 = scmp.eq.s32.totalorder %s61, 0
      %s64 = sadd.s32 %s63, 1
      %s65 = scalar_select %p62, %s63, %s64
      %p68 = pneg %p62
      %p69 = scmp.eq.s32.totalorder %s11, 2
      %p70 = por %p68, %p69
      %p71 = scmp.ne.s32.totalorder %s63, %s66
      %p72 = scmp.eq.s32.totalorder %s11, 0
      %p73 = por %p71, %p72
      %p74 = scmp.ne.s32.totalorder %s63, %s66
      %p75 = scmp.eq.s32.totalorder %s16, 2
      %p76 = por %p74, %p75
      %p77 = scmp.ne.s32.totalorder %s66, %s67
      %p78 = scmp.eq.s32.totalorder %s16, 0
      %p79 = por %p77, %p78
      %p80 = scmp.ne.s32.totalorder %s66, %s67
      %p81 = scmp.eq.s32.totalorder %s17, 2
      %p82 = por %p80, %p81
      %p84 = scmp.ne.s32.totalorder %s67, %s83
      %p85 = scmp.eq.s32.totalorder %s17, 0
      %p86 = por %p84, %p85
      %p87 = scmp.le.s32.totalorder 1, %s11
      %p88 = scmp.lt.s32.totalorder %s11, 4
      %p89 = pnand %p87, %p88
      %p90 = pneg %p89
      // Predicated region
      $region9: #{tpu_custom_call.1} parent=5 // pred_check
        _
      $region10: #{tpu_custom_call.1} parent=5 // pred_check_branch
        %92 = sbr.rel (%p89) target = $region12
      $region11: #{tpu_custom_call.1} parent=5 // pred_region
        %s93 = ssub.s32 %s11, 1
      $region12: #{tpu_custom_call.1} parent=5 // pred_fallthru
        _
      %p94 = scmp.lt.s32.totalorder %s11, 3
      // Predicated region
      $region13: #{tpu_custom_call.1} parent=5 // pred_check
        %p95 = pneg %p94
      $region14: #{tpu_custom_call.1} parent=5 // pred_check_branch
        %97 = sbr.rel (%p95) target = $region16
      $region15: #{tpu_custom_call.1} parent=5 // pred_region
        // Predicated region
        $region17: #{tpu_custom_call.1} parent=15 // pred_check
          %p98 = pneg %p47
        $region18: #{tpu_custom_call.1} parent=15 // pred_check_branch
          %100 = sbr.rel (%p98) target = $region20
        $region19: #{tpu_custom_call.1} parent=15 // pred_region
          %s101 = sand.u32 %s37, 1
          %s102 = scalar_lea.sflag [#allocation3], %s101
          %s103 = sand.u32 %s37, 1
          %s104 = smul.addr %s103, 24
          %s105 = scalar_lea.vmem [#allocation2], %s104
          %s106 = smul.u32 %s18, 3
          %s107 = sadd.s32 %s106, %s19
          %s108 = smul.u32 3, %s107
          %s110 = ssub.s32 384, 384
          %111 = vsyncadd %s102, %s110
          %s112 = smul.addr %s108, 128
          %s113 = scalar_lea.hbm %s0, %s112
          %s115 = sshll.u32 %s105, 4
          %s116 = int_to_ptr.vmem [resolvable:$true] %s115
          %118 = dma.hbm_to_vmem [thread:$0]  %s113, 384, %s116, %s102
        $region20: #{tpu_custom_call.1} parent=15 // pred_fallthru
          _
      $region16: #{tpu_custom_call.1} parent=5 // pred_fallthru
        _
      %p119 = scmp.le.s32.totalorder 1, %s11
      %p120 = scmp.lt.s32.totalorder %s11, 4
      %p121 = pnand %p119, %p120
      %p122 = pneg %p121
      // Predicated region
      $region21: #{tpu_custom_call.1} parent=5 // pred_check
        _
      $region22: #{tpu_custom_call.1} parent=5 // pred_check_branch
        %124 = sbr.rel (%p121) target = $region24
      $region23: #{tpu_custom_call.1} parent=5 // pred_region
        %s125 = ssub.s32 %s11, 1
        %s126 = sand.u32 %s40, 1
        %s127 = scalar_lea.sflag [#allocation3], %s126
        %s128 = sand.u32 %s40, 1
        %s129 = smul.addr %s128, 24
        %s130 = scalar_lea.vmem [#allocation2], %s129
        // Predicated region
        $region25: #{tpu_custom_call.1} parent=23 // pred_check
          %p131 = pneg %p53
        $region26: #{tpu_custom_call.1} parent=23 // pred_check_branch
          %133 = sbr.rel (%p131) target = $region28
        $region27: #{tpu_custom_call.1} parent=23 // pred_region
          %134 = dma.done %s127, 384
        $region28: #{tpu_custom_call.1} parent=23 // pred_fallthru
          _
        %s135 = sand.u32 %s40, 1
        %s136 = scalar_lea.sflag [#allocation3], %s135
        %s137 = sand.u32 %s40, 1
        %s138 = smul.addr %s137, 24
        %s139 = scalar_lea.vmem [#allocation2], %s138
        %p140 = pneg %p53
        %p141 = pneg %p50
        %p142 = pneg %p79
        %p143 = pneg %p76
        %s144 = smul.u32 %s20, 3
        %s145 = sadd.s32 %s144, %s21
        %s146 = smul.u32 3, %s145
        %p147 = scmp.eq.s32.totalorder %s21, 0
        // Predicated region
        $region29: #{tpu_custom_call.1} parent=23 // pred_check
          %p148 = pneg %p147
        $region30: #{tpu_custom_call.1} parent=23 // pred_check_branch
          %150 = sbr.rel (%p148) target = $region32
        $region31: #{tpu_custom_call.1} parent=23 // pred_region
          %vm151 = vcmask 64512
          %152 = vst.msk [vmem:[#allocation5] sm:$0xff] %vm151, 0.0
        $region32: #{tpu_custom_call.1} parent=23 // pred_fallthru
          _
        %v153 = vld [vmem:[%s130] sm:$0xff]
        %v154 = vld [vmem:[%s130 + $0x8] sm:$0xff]
        %v155 = vld [vmem:[%s130 + $0x10] sm:$0xff]
        %v156 = vld [vmem:[#allocation5] sm:$0xff]
        %157 = vmatprep.subr.mxu0 0.0
        %158 = vmatpush1.xpose.msra.mxu0 0.0
        %159 = vmatprep.subr.mxu0 0.0
        %160 = vmatpush1.xpose.msra.mxu0 0.0
        %161 = vmatprep.subr.mxu0 0.0
        %162 = vmatpush1.xpose.msra.mxu0 0.0
        %163 = vmatprep.subr.mxu0 0.0
        %164 = vmatpush1.xpose.msra.mxu0 0.0
        %165 = vmatprep.subr.mxu0 0.0
        %166 = vmatpush1.xpose.msra.mxu0 0.0
        %167 = vmatprep.subr.mxu0 0.0
        %168 = vmatpush1.xpose.msra.mxu0 0.0
        %169 = vmatprep.subr.mxu0 0.0
        %170 = vmatpush1.xpose.msra.mxu0 0.0
        %171 = vmatprep.subr.mxu0 0.0
        %172 = vmatpush1.xpose.msra.mxu0 0.0
        %173 = vmatprep.subr.mxu0 0.0
        %174 = vmatpush1.xpose.msra.mxu0 0.0
        %175 = vmatprep.subr.mxu0 0.0
        %176 = vmatpush1.xpose.msra.mxu0 0.0
        %177 = vmatprep.subr.mxu0 0.0
        %178 = vmatpush1.xpose.msra.mxu0 0.0
        %179 = vmatprep.subr.mxu0 0.0
        %180 = vmatpush1.xpose.msra.mxu0 0.0
        %181 = vmatprep.subr.mxu0 0.0
        %182 = vmatpush1.xpose.msra.mxu0 0.0
        %183 = vmatprep.subr.mxu0 0.0
        %184 = vmatpush1.xpose.msra.mxu0 0.0
        %185 = vmatprep.subr.mxu0 0.0
        %186 = vmatpush1.xpose.msra.mxu0 0.0
        %187 = vmatprep.subr.mxu0 %v154
        %188 = vmatpush1.xpose.msra.mxu0 %v153
        %189 = vmatprep.subr.mxu0 0.0
        %190 = vmatpush2.xpose.msra.mxu0 0.0
        %191 = vmatprep.subr.mxu0 0.0
        %192 = vmatpush2.xpose.msra.mxu0 0.0
        %193 = vmatprep.subr.mxu0 0.0
        %194 = vmatpush2.xpose.msra.mxu0 0.0
        %195 = vmatprep.subr.mxu0 0.0
        %196 = vmatpush2.xpose.msra.mxu0 0.0
        %197 = vmatprep.subr.mxu0 0.0
        %198 = vmatpush2.xpose.msra.mxu0 0.0
        %199 = vmatprep.subr.mxu0 0.0
        %200 = vmatpush2.xpose.msra.mxu0 0.0
        %201 = vmatprep.subr.mxu0 0.0
        %202 = vmatpush2.xpose.msra.mxu0 0.0
        %203 = vmatprep.subr.mxu0 0.0
        %204 = vmatpush2.xpose.msra.mxu0 0.0
        %205 = vmatprep.subr.mxu0 0.0
        %206 = vmatpush2.xpose.msra.mxu0 0.0
        %207 = vmatprep.subr.mxu0 0.0
        %208 = vmatpush2.xpose.msra.mxu0 0.0
        %209 = vmatprep.subr.mxu0 0.0
        %210 = vmatpush2.xpose.msra.mxu0 0.0
        %211 = vmatprep.subr.mxu0 0.0
        %212 = vmatpush2.xpose.msra.mxu0 0.0
        %213 = vmatprep.subr.mxu0 0.0
        %214 = vmatpush2.xpose.msra.mxu0 0.0
        %215 = vmatprep.subr.mxu0 0.0
        %216 = vmatpush2.xpose.msra.mxu0 0.0
        %217 = vmatprep.subr.mxu0 0.0
        %218 = vmatpush2.xpose.msra.mxu0 0.0
        %219 = vmatprep.subr.mxu0 0.0
        %220 = vmatpush2.xpose.msra.mxu0 0.0
        %221 = vmatprep.mubr.f32.mxu0 %v154
        %222 = vmatmul.mubr.f32.gmra.mxu0 %v153
        %v223 = vpop.f32.mrf.mxu0
        %v224 = vadd.f32 0.0, %v223
        %v225 = vpop.f32.mrf.mxu0
        %226 = vdwg.mxu0
        %227 = vmatprep.subr.mxu0 0.0
        %228 = vmatpush1.xpose.msra.mxu0 0.0
        %229 = vmatprep.subr.mxu0 0.0
        %230 = vmatpush1.xpose.msra.mxu0 0.0
        %231 = vmatprep.subr.mxu0 0.0
        %232 = vmatpush1.xpose.msra.mxu0 0.0
        %233 = vmatprep.subr.mxu0 0.0
        %234 = vmatpush1.xpose.msra.mxu0 0.0
        %235 = vmatprep.subr.mxu0 0.0
        %236 = vmatpush1.xpose.msra.mxu0 0.0
        %237 = vmatprep.subr.mxu0 0.0
        %238 = vmatpush1.xpose.msra.mxu0 0.0
        %239 = vmatprep.subr.mxu0 0.0
        %240 = vmatpush1.xpose.msra.mxu0 0.0
        %241 = vmatprep.subr.mxu0 0.0
        %242 = vmatpush1.xpose.msra.mxu0 0.0
        %243 = vmatprep.subr.mxu0 0.0
        %244 = vmatpush1.xpose.msra.mxu0 0.0
        %245 = vmatprep.subr.mxu0 0.0
        %246 = vmatpush1.xpose.msra.mxu0 0.0
        %247 = vmatprep.subr.mxu0 0.0
        %248 = vmatpush1.xpose.msra.mxu0 0.0
        %249 = vmatprep.subr.mxu0 0.0
        %250 = vmatpush1.xpose.msra.mxu0 0.0
        %251 = vmatprep.subr.mxu0 0.0
        %252 = vmatpush1.xpose.msra.mxu0 0.0
        %253 = vmatprep.subr.mxu0 0.0
        %254 = vmatpush1.xpose.msra.mxu0 0.0
        %255 = vmatprep.subr.mxu0 0.0
        %256 = vmatpush1.xpose.msra.mxu0 0.0
        %257 = vmatprep.subr.mxu0 0.0
        %258 = vmatpush1.xpose.msra.mxu0 %v155
        %259 = vmatprep.subr.mxu0 0.0
        %260 = vmatpush2.xpose.msra.mxu0 0.0
        %261 = vmatprep.subr.mxu0 0.0
        %262 = vmatpush2.xpose.msra.mxu0 0.0
        %263 = vmatprep.subr.mxu0 0.0
        %264 = vmatpush2.xpose.msra.mxu0 0.0
        %265 = vmatprep.subr.mxu0 0.0
        %266 = vmatpush2.xpose.msra.mxu0 0.0
        %267 = vmatprep.subr.mxu0 0.0
        %268 = vmatpush2.xpose.msra.mxu0 0.0
        %269 = vmatprep.subr.mxu0 0.0
        %270 = vmatpush2.xpose.msra.mxu0 0.0
        %271 = vmatprep.subr.mxu0 0.0
        %272 = vmatpush2.xpose.msra.mxu0 0.0
        %273 = vmatprep.subr.mxu0 0.0
        %274 = vmatpush2.xpose.msra.mxu0 0.0
        %275 = vmatprep.subr.mxu0 0.0
        %276 = vmatpush2.xpose.msra.mxu0 0.0
        %277 = vmatprep.subr.mxu0 0.0
        %278 = vmatpush2.xpose.msra.mxu0 0.0
        %279 = vmatprep.subr.mxu0 0.0
        %280 = vmatpush2.xpose.msra.mxu0 0.0
        %281 = vmatprep.subr.mxu0 0.0
        %282 = vmatpush2.xpose.msra.mxu0 0.0
        %283 = vmatprep.subr.mxu0 0.0
        %284 = vmatpush2.xpose.msra.mxu0 0.0
        %285 = vmatprep.subr.mxu0 0.0
        %286 = vmatpush2.xpose.msra.mxu0 0.0
        %287 = vmatprep.subr.mxu0 0.0
        %288 = vmatpush2.xpose.msra.mxu0 0.0
        %289 = vmatprep.subr.mxu0 0.0
        %290 = vmatpush2.xpose.msra.mxu0 0.0
        %291 = vmatprep.mubr.f32.mxu0 0.0
        %292 = vmatmul.mubr.f32.gmra.mxu0 %v155
        %v293 = vpop.f32.mrf.mxu0
        %v294 = vadd.f32 %v224, %v293
        %v295 = vpop.f32.mrf.mxu0
        %296 = vdwg.mxu0
        %v297 = vadd.f32 %v156, %v294
        %vm298 = vcmask 64512
        %299 = vst.msk [vmem:[#allocation5] sm:$0xff] %vm298, %v297
        // Predicated region
        $region33: #{tpu_custom_call.1} parent=23 // pred_check
          %p300 = pneg %p76
        $region34: #{tpu_custom_call.1} parent=23 // pred_check_branch
          %302 = sbr.rel (%p300) target = $region36
        $region35: #{tpu_custom_call.1} parent=23 // pred_region
          %s304 = ssub.s32 128, 128
          %305 = vsyncadd [#allocation4], %s304
          %s306 = smul.addr %s20, 128
          %s307 = scalar_lea.hbm %s1, %s306
          %s309 = sshll.u32 [#allocation5], 4
          %s310 = int_to_ptr.vmem [resolvable:$true] %s309
          %312 = dma.vmem_to_hbm [thread:$0]  %s310, 128, %s307, [#allocation4]
        $region36: #{tpu_custom_call.1} parent=23 // pred_fallthru
          _
        // Predicated region
        $region37: #{tpu_custom_call.1} parent=23 // pred_check
          %p313 = pneg %p76
        $region38: #{tpu_custom_call.1} parent=23 // pred_check_branch
          %315 = sbr.rel (%p313) target = $region40
        $region39: #{tpu_custom_call.1} parent=23 // pred_region
          %316 = dma.done [#allocation4], 128
        $region40: #{tpu_custom_call.1} parent=23 // pred_fallthru
          _
      $region24: #{tpu_custom_call.1} parent=5 // pred_fallthru
        _
      %p317 = scmp.le.s32.totalorder 2, %s11
      // Predicated region
      $region41: #{tpu_custom_call.1} parent=5 // pred_check
        %p318 = pneg %p317
      $region42: #{tpu_custom_call.1} parent=5 // pred_check_branch
        %320 = sbr.rel (%p318) target = $region44
      $region43: #{tpu_custom_call.1} parent=5 // pred_region
        %s321 = ssub.s32 %s11, 2
      $region44: #{tpu_custom_call.1} parent=5 // pred_fallthru
        _
    $region6: #{tpu_custom_call.1} parent=1 // loop_footer
      %s15 = sadd.s32 1, %s11
    $region7: #{tpu_custom_call.1} parent=1 // loop_footer_branch
      %10 = sbr.rel target = $region3
    $region8: #{tpu_custom_call.1} parent=1 // loop_exit
      _
    %322 = vsyncpa [#allocation3], 1
    %s323 = scalar_lea.sflag [#allocation3], 1
    %324 = vsyncpa %s323, 1
    %325 = vsyncpa [#allocation4], 1
    %s326 = scalar_lea.sflag [#allocation4], 1
    %327 = vsyncpa %s326, 1

</llo_original>
